<compile_context>
chip_gen: v6e
topology: v6e:2x2x1
jax: 0.10.0
libtpu: 0.0.40
codegen_flags: <defaults>
</compile_context>

<pallas_src>
import jax
import jax.numpy as jnp
from jax.experimental import pallas as pl
from jax.experimental.pallas import tpu as pltpu


def _pick_tiles(B, N, T, F_in, F_out, dtype_bytes=4,
                vmem_budget=16 * 1024 * 1024, max_tile_b=8):
    """Choose (tile_b, tile_t).

    tile_t: smallest divisor of T whose fused lane axes (tile_t*F_in,
            tile_t*F_out) are >= 256 lanes (or the full T), and whose working
            set fits; sub-T tiles must keep the fused lane axes 128-aligned
            for legal, dense blocks.
    tile_b: largest divisor of B (capped) that still fits the VMEM budget.
    """
    legal_tt = [d for d in range(1, T + 1) if T % d == 0 and
                (d == T or ((d * F_in) % 128 == 0 and (d * F_out) % 128 == 0))]

    def ws(tb, tt):
        return dtype_bytes * (
            2 * tb * N * tt * (F_in + F_out)   # double-buffered x / out tiles
            + 2 * N * N                        # resident adjacency (2 bufs)
            + 2 * tt * tt * F_in * F_out       # resident block-diag Theta (2 bufs)
        )

    dense = sorted(d for d in legal_tt
                   if d == T or (d * F_in >= 256 and d * F_out >= 256))
    candidates = dense + sorted(legal_tt, reverse=True)
    tile_t = None
    for d in candidates:
        if ws(1, d) <= vmem_budget:
            tile_t = d
            break
    if tile_t is None:
        # TODO(synk): pathological shapes (huge N*T*F) would need tiling over N too.
        tile_t = min(legal_tt)

    tile_b = 1
    for d in range(1, min(B, max_tile_b) + 1):
        if B % d == 0 and ws(d, tile_t) <= vmem_budget:
            tile_b = d
    return tile_b, tile_t


def spatial_gcn(x, adj, theta_weight, *, tile_b=None, tile_t=None):
    """
    x:            (B, N, T, F_in)  float32
    adj:          (N, N)           float32 (sym-normalized adjacency)
    theta_weight: (F_out, F_in)    float32 (nn.Linear weight, no bias)
    returns:      (B, N, T, F_out) float32
    """
    B, N, T, F_in = x.shape
    F_out = theta_weight.shape[0]

    auto_b, auto_t = _pick_tiles(B, N, T, F_in, F_out,
                                 dtype_bytes=jnp.dtype(x.dtype).itemsize)
    if tile_b is None:
        tile_b = auto_b
    if tile_t is None:
        tile_t = auto_t
    assert B % tile_b == 0 and T % tile_t == 0
    assert tile_t == T or ((tile_t * F_in) % 128 == 0 and
                           (tile_t * F_out) % 128 == 0)
    n_b = B // tile_b
    n_t = T // tile_t

    # Free (no data movement) merge of the two trailing dims: lane axis = T*F_in.
    x_f = x.reshape(B, N, T * F_in)

    # Block-diagonal W^T: applies Theta independently to each of the tile_t
    # timesteps fused onto the lane axis.  Built once; small and VMEM-resident.
    wt = theta_weight.T.astype(x.dtype)                      # (F_in, F_out)
    eye = jnp.eye(tile_t, dtype=x.dtype)
    w_blk = jnp.einsum("ab,io->aibo", eye, wt).reshape(
        tile_t * F_in, tile_t * F_out
    )

    theta_first = F_out < F_in  # cheaper ordering of A @ X @ W^T

    def kernel(adj_ref, x_ref, wblk_ref, out_ref):
        a = adj_ref[...]          # (N, N)
        w = wblk_ref[...]         # (tile_t*F_in, tile_t*F_out)
        # Static unrolled loop over the batch tile: each iteration is a pair of
        # lane-dense 2-D MXU matmuls (avoids broadcasting A to a batched dot).
        for bi in range(tile_b):
            xv = x_ref[bi]        # (N, tile_t*F_in)   lane-dense slab
            if theta_first:
                xw = jnp.dot(xv, w, preferred_element_type=jnp.float32)
                y = jnp.dot(a, xw, preferred_element_type=jnp.float32)
            else:
                ax = jnp.dot(a, xv, preferred_element_type=jnp.float32)
                y = jnp.dot(ax, w, preferred_element_type=jnp.float32)
            out_ref[bi] = jnp.maximum(y, 0.0).astype(out_ref.dtype)

    out_f = pl.pallas_call(
        kernel,
        out_shape=jax.ShapeDtypeStruct((B, N, T * F_out), x.dtype),
        grid_spec=pltpu.PrefetchScalarGridSpec(
            num_scalar_prefetch=0,
            grid=(n_b, n_t),
            in_specs=[
                # adjacency: shared / VMEM-resident across the whole grid
                pl.BlockSpec((N, N), lambda b, t: (0, 0)),
                # a (tile_b, N, tile_t*F_in) slab; T and F fused on the lane axis
                pl.BlockSpec((tile_b, N, tile_t * F_in), lambda b, t: (b, 0, t)),
                # block-diag Theta: shared / VMEM-resident
                pl.BlockSpec(
                    (tile_t * F_in, tile_t * F_out), lambda b, t: (0, 0)
                ),
            ],
            out_specs=pl.BlockSpec(
                (tile_b, N, tile_t * F_out), lambda b, t: (b, 0, t)
            ),
        ),
        compiler_params=pltpu.CompilerParams(
            dimension_semantics=("parallel", "parallel"),
            vmem_limit_bytes=32 * 1024 * 1024,
        ),
    )(adj.astype(x.dtype), x_f, w_blk)

    # Free split of the fused lane axis back to (T, F_out).
    return out_f.reshape(B, N, T, F_out)


def _reference(x, adj, theta_weight):
    # Pure-JAX reference mirroring the PyTorch forward exactly.
    B, N, T, F_in = x.shape
    F_out = theta_weight.shape[0]
    x_bt = jnp.transpose(x, (0, 2, 1, 3)).reshape(B * T, N, F_in)
    ax = jnp.einsum("ij,bjf->bif", adj, x_bt)
    y = jnp.maximum(ax @ theta_weight.T, 0.0).reshape(B, T, N, F_out)
    return jnp.transpose(y, (0, 2, 1, 3))


if __name__ == "__main__":
    key = jax.random.PRNGKey(0)
    k_x, k_adj, k_w = jax.random.split(key, 3)

    # Small shapes consistent with the forward: (B, N, T, F_in)
    B, N, T, F_in, F_out = 2, 16, 8, 4, 8

    x = jax.random.normal(k_x, (B, N, T, F_in), dtype=jnp.float32)

    # Deterministic symmetric-normalized adjacency: A_sym = D^-1/2 (A+I) D^-1/2
    a_raw = (jax.random.uniform(k_adj, (N, N)) > 0.6).astype(jnp.float32)
    a_raw = jnp.maximum(a_raw, a_raw.T) + jnp.eye(N, dtype=jnp.float32)
    deg = jnp.sum(a_raw, axis=1)
    d_inv_sqrt = 1.0 / jnp.sqrt(deg)
    adj = a_raw * d_inv_sqrt[:, None] * d_inv_sqrt[None, :]

    # Theta: nn.Linear(in_channels, out_channels, bias=False) -> weight (F_out, F_in)
    theta_weight = jax.random.normal(k_w, (F_out, F_in), dtype=jnp.float32) * 0.1

    ref = _reference(x, adj, theta_weight)

    # Auto-picked tiles (tile_b = B here -> single grid step).
    out = jax.block_until_ready(spatial_gcn(x, adj, theta_weight))
    assert out.shape == (B, N, T, F_out)
    assert jnp.allclose(out, ref, atol=1e-5, rtol=1e-5)

    # Also exercise a multi-step grid (one batch per step).
    out2 = jax.block_until_ready(spatial_gcn(x, adj, theta_weight, tile_b=1))
    assert jnp.allclose(out2, ref, atol=1e-5, rtol=1e-5)

    print("KERNEL_OK")
</pallas_src>

<mosaic_0001>
module attributes {stable_mosaic.version = 11 : i64} {
  func.func @kernel(%arg0: i32, %arg1: i32, %arg2: memref<16x16xf32, #tpu.memory_space<vmem>>, %arg3: memref<2x16x32xf32, #tpu.memory_space<vmem>>, %arg4: memref<32x64xf32, #tpu.memory_space<vmem>>, %arg5: memref<2x16x64xf32, #tpu.memory_space<vmem>>) attributes {dimension_semantics = [#tpu.dimension_semantics<parallel>, #tpu.dimension_semantics<parallel>], iteration_bounds = array<i64: 1, 1>, scalar_prefetch = 0 : i64, scratch_operands = 0 : i64, tpu.core_type = #tpu.core_type<tc>, window_params = [{pipeline_mode = #tpu.pipeline_mode<synchronous>, transform_indices = @transform_0, window_bounds = array<i64: 16, 16>}, {transform_indices = @transform_1, window_bounds = array<i64: 2, 16, 32>}, {pipeline_mode = #tpu.pipeline_mode<synchronous>, transform_indices = @transform_2, window_bounds = array<i64: 32, 64>}, {transform_indices = @transform_3, window_bounds = array<i64: 2, 16, 64>}]} {
    %c0 = arith.constant 0 : index
    %c0_0 = arith.constant 0 : index
    %0 = vector.load %arg2[%c0, %c0_0] : memref<16x16xf32, #tpu.memory_space<vmem>>, vector<16x16xf32>
    %c0_1 = arith.constant 0 : index
    %c0_2 = arith.constant 0 : index
    %1 = vector.load %arg4[%c0_1, %c0_2] : memref<32x64xf32, #tpu.memory_space<vmem>>, vector<32x64xf32>
    %c0_3 = arith.constant 0 : index
    %c0_4 = arith.constant 0 : index
    %c0_5 = arith.constant 0 : index
    %2 = vector.load %arg3[%c0_3, %c0_4, %c0_5] : memref<2x16x32xf32, #tpu.memory_space<vmem>>, vector<1x16x32xf32>
    %3 = vector.shape_cast %2 : vector<1x16x32xf32> to vector<16x32xf32>
    %cst = arith.constant dense<0.000000e+00> : vector<16x32xf32>
    %4 = tpu.matmul %0, %3, %cst {dimension_numbers = #tpu.dot_dimension_numbers<[1], [0], [0], [1], [0, 0, 1, 1], [], []>} : vector<16x16xf32>, vector<16x32xf32>, vector<16x32xf32> -> vector<16x32xf32>
    %cst_6 = arith.constant dense<0.000000e+00> : vector<16x64xf32>
    %5 = tpu.matmul %4, %1, %cst_6 {dimension_numbers = #tpu.dot_dimension_numbers<[1], [0], [0], [1], [0, 0, 1, 1], [], []>} : vector<16x32xf32>, vector<32x64xf32>, vector<16x64xf32> -> vector<16x64xf32>
    %cst_7 = arith.constant 0.000000e+00 : f32
    %6 = vector.broadcast %cst_7 : f32 to vector<16x64xf32>
    %7 = arith.maximumf %5, %6 : vector<16x64xf32>
    %c0_8 = arith.constant 0 : index
    %c0_9 = arith.constant 0 : index
    %c0_10 = arith.constant 0 : index
    %8 = vector.load %arg5[%c0_8, %c0_9, %c0_10] : memref<2x16x64xf32, #tpu.memory_space<vmem>>, vector<1x16x64xf32>
    %9 = vector.shape_cast %8 : vector<1x16x64xf32> to vector<16x64xf32>
    %10 = vector.shape_cast %7 : vector<16x64xf32> to vector<1x16x64xf32>
    tpu.vector_store %arg5[%c0_8, %c0_9, %c0_10], %10 {strides = array<i32>} : memref<2x16x64xf32, #tpu.memory_space<vmem>>, vector<1x16x64xf32>,
    %c1 = arith.constant 1 : index
    %c0_11 = arith.constant 0 : index
    %c0_12 = arith.constant 0 : index
    %11 = vector.load %arg3[%c1, %c0_11, %c0_12] : memref<2x16x32xf32, #tpu.memory_space<vmem>>, vector<1x16x32xf32>
    %12 = vector.shape_cast %11 : vector<1x16x32xf32> to vector<16x32xf32>
    %cst_13 = arith.constant dense<0.000000e+00> : vector<16x32xf32>
    %13 = tpu.matmul %0, %12, %cst_13 {dimension_numbers = #tpu.dot_dimension_numbers<[1], [0], [0], [1], [0, 0, 1, 1], [], []>} : vector<16x16xf32>, vector<16x32xf32>, vector<16x32xf32> -> vector<16x32xf32>
    %cst_14 = arith.constant dense<0.000000e+00> : vector<16x64xf32>
    %14 = tpu.matmul %13, %1, %cst_14 {dimension_numbers = #tpu.dot_dimension_numbers<[1], [0], [0], [1], [0, 0, 1, 1], [], []>} : vector<16x32xf32>, vector<32x64xf32>, vector<16x64xf32> -> vector<16x64xf32>
    %cst_15 = arith.constant 0.000000e+00 : f32
    %15 = vector.broadcast %cst_15 : f32 to vector<16x64xf32>
    %16 = arith.maximumf %14, %15 : vector<16x64xf32>
    %c1_16 = arith.constant 1 : index
    %c0_17 = arith.constant 0 : index
    %c0_18 = arith.constant 0 : index
    %17 = vector.load %arg5[%c1_16, %c0_17, %c0_18] : memref<2x16x64xf32, #tpu.memory_space<vmem>>, vector<1x16x64xf32>
    %18 = vector.shape_cast %17 : vector<1x16x64xf32> to vector<16x64xf32>
    %19 = vector.shape_cast %16 : vector<16x64xf32> to vector<1x16x64xf32>
    tpu.vector_store %arg5[%c1_16, %c0_17, %c0_18], %19 {strides = array<i32>} : memref<2x16x64xf32, #tpu.memory_space<vmem>>, vector<1x16x64xf32>,
    return
  }
  func.func @transform_0(%arg0: i32, %arg1: i32) -> (i32, i32) {
    %c0_i32 = arith.constant 0 : i32
    %c0_i32_0 = arith.constant 0 : i32
    %c0_i32_1 = arith.constant 0 : i32
    return %c0_i32, %c0_i32_0 : i32, i32
  }
  func.func @transform_1(%arg0: i32, %arg1: i32) -> (i32, i32, i32) {
    %c0_i32 = arith.constant 0 : i32
    %c0_i32_0 = arith.constant 0 : i32
    return %arg0, %c0_i32, %arg1 : i32, i32, i32
  }
  func.func @transform_2(%arg0: i32, %arg1: i32) -> (i32, i32) {
    %c0_i32 = arith.constant 0 : i32
    %c0_i32_0 = arith.constant 0 : i32
    %c0_i32_1 = arith.constant 0 : i32
    return %c0_i32, %c0_i32_0 : i32, i32
  }
  func.func @transform_3(%arg0: i32, %arg1: i32) -> (i32, i32, i32) {
    %c0_i32 = arith.constant 0 : i32
    %c0_i32_0 = arith.constant 0 : i32
    return %arg0, %c0_i32, %arg1 : i32, i32, i32
  }
}

</mosaic_0001>

<llo_original>
// kernel: tpu_custom_call.1
$region0: #{tpu_custom_call.1}
  #allocation0 [shape = 'u32[]', space=smem, size = 0x4, offset = 0x4, fixed_abs, tag = 'smem constant byte address 0x4 - core index']
  #allocation1 [shape = 'u32[144,128]{1,0:T(1,128)}', space=vmem, size = 0x12000, scoped, tag = 'internal scratch']
  %s0 = inlined_call_operand.hbm [shape: f32[16,16], index: 0, kind: input, shape index: {}]
  %s1 = inlined_call_operand.hbm [shape: f32[2,16,32], index: 1, kind: input, shape index: {}]
  %s2 = inlined_call_operand.hbm [shape: f32[32,64], index: 2, kind: input, shape index: {}]
  %s3 = inlined_call_operand.hbm [shape: f32[2,16,64], index: 3, kind: output, shape index: {}]
  %s4 = sld [smem:[#allocation0]]
  $region34: #{tpu_custom_call.1} parent=0
    _
  %s6 = ssub.s32 1, %s4
  %s7 = scalar_select 0, %s6, %s4
  $region1: #{tpu_custom_call.1} parent=0
    #allocation2 [shape = 'u8[8192]{0}', space=vmem, size = 0x2000, scoped, tag = 'input window, operand 0, single buffered']
    #allocation3 [shape = 's32[1]{0}', space=sflag, size = 0x4, scoped, tag = 'scoped memory for tpu_custom_call.1']
    #allocation4 [shape = 's32[1]{0}', space=sflag, size = 0x4, scoped, tag = 'scoped memory for tpu_custom_call.1']
    #allocation5 [shape = 'u8[16384]{0}', space=vmem, size = 0x4000, scoped, tag = 'input window, operand 1, single buffered']
    #allocation6 [shape = 's32[1]{0}', space=sflag, size = 0x4, scoped, tag = 'scoped memory for tpu_custom_call.1']
    #allocation7 [shape = 'u8[16384]{0}', space=vmem, size = 0x4000, scoped, tag = 'input window, operand 2, single buffered']
    #allocation8 [shape = 'u8[16384]{0}', space=vmem, size = 0x4000, scoped, tag = 'output window, operand 0, single buffered']
    %8 = vsyncpa [#allocation3], 0
    %9 = vsyncpa [#allocation6], 0
    %10 = vsyncpa [#allocation4], 0
    // Predicated region
    $region2: #{tpu_custom_call.1} parent=1 // pred_check
      _
    $region3: #{tpu_custom_call.1} parent=1 // pred_check_branch
      %12 = sbr.rel (0) target = $region5
    $region4: #{tpu_custom_call.1} parent=1 // pred_region
      %s14 = ssub.s32 256, 256
      %15 = vsyncadd [#allocation3], %s14
      %s16 = sshll.u32 [#allocation2], 4
      %s17 = int_to_ptr.vmem [resolvable:$true] %s16
      %22 = dma.hbm_to_vmem [thread:$0]  %s0, 256, %s17, [#allocation3], 128, 128, 8
    $region5: #{tpu_custom_call.1} parent=1 // pred_fallthru
      _
    // Predicated region
    $region6: #{tpu_custom_call.1} parent=1 // pred_check
      _
    $region7: #{tpu_custom_call.1} parent=1 // pred_check_branch
      %24 = sbr.rel (0) target = $region9
    $region8: #{tpu_custom_call.1} parent=1 // pred_region
      %s26 = ssub.s32 512, 512
      %27 = vsyncadd [#allocation6], %s26
      %s28 = sshll.u32 [#allocation5], 4
      %s29 = int_to_ptr.vmem [resolvable:$true] %s28
      %34 = dma.hbm_to_vmem [thread:$0]  %s1, 512, %s29, [#allocation6], 128, 128, 8
    $region9: #{tpu_custom_call.1} parent=1 // pred_fallthru
      _
    // Predicated region
    $region10: #{tpu_custom_call.1} parent=1 // pred_check
      _
    $region11: #{tpu_custom_call.1} parent=1 // pred_check_branch
      %36 = sbr.rel (0) target = $region13
    $region12: #{tpu_custom_call.1} parent=1 // pred_region
      %s38 = ssub.s32 512, 512
      %39 = vsyncadd [#allocation6], %s38
      %s40 = sshll.u32 [#allocation7], 4
      %s41 = int_to_ptr.vmem [resolvable:$true] %s40
      %46 = dma.hbm_to_vmem [thread:$0]  %s2, 512, %s41, [#allocation6], 128, 128, 8
    $region13: #{tpu_custom_call.1} parent=1 // pred_fallthru
      _
    // Predicated region
    $region14: #{tpu_custom_call.1} parent=1 // pred_check
      _
    $region15: #{tpu_custom_call.1} parent=1 // pred_check_branch
      %48 = sbr.rel (0) target = $region17
    $region16: #{tpu_custom_call.1} parent=1 // pred_region
      %49 = dma.done [#allocation3], 256
    $region17: #{tpu_custom_call.1} parent=1 // pred_fallthru
      _
    // Predicated region
    $region18: #{tpu_custom_call.1} parent=1 // pred_check
      _
    $region19: #{tpu_custom_call.1} parent=1 // pred_check_branch
      %51 = sbr.rel (0) target = $region21
    $region20: #{tpu_custom_call.1} parent=1 // pred_region
      %52 = dma.done [#allocation6], 512
    $region21: #{tpu_custom_call.1} parent=1 // pred_fallthru
      _
    // Predicated region
    $region22: #{tpu_custom_call.1} parent=1 // pred_check
      _
    $region23: #{tpu_custom_call.1} parent=1 // pred_check_branch
      %54 = sbr.rel (0) target = $region25
    $region24: #{tpu_custom_call.1} parent=1 // pred_region
      %55 = dma.done [#allocation6], 512
    $region25: #{tpu_custom_call.1} parent=1 // pred_fallthru
      _
    %v56 = vld [vmem:[#allocation2] sm:$0xff]
    %v57 = vld [vmem:[#allocation2 + $0x8] sm:$0xff]
    %v58 = vld [vmem:[#allocation7] sm:$0xff]
    %v59 = vld [vmem:[#allocation7 + $0x8] sm:$0xff]
    %v60 = vld [vmem:[#allocation7 + $0x10] sm:$0xff]
    %v61 = vld [vmem:[#allocation7 + $0x18] sm:$0xff]
    %v62 = vld [vmem:[#allocation5] sm:$0xff]
    %v63 = vld [vmem:[#allocation5 + $0x8] sm:$0xff]
    %vm64 = vcmask 130048
    %v66 = vsel %vm64, %v56, 0
    %v69 = vsel %vm64, %v57, 0
    %71 = vmatprep.subr.mxu0 0.0
    %72 = vmatpush1.msra.mxu0 0.0
    %73 = vmatprep.subr.mxu0 0.0
    %74 = vmatpush1.msra.mxu0 0.0
    %75 = vmatprep.subr.mxu0 0.0
    %76 = vmatpush1.msra.mxu0 0.0
    %77 = vmatprep.subr.mxu0 0.0
    %78 = vmatpush1.msra.mxu0 0.0
    %79 = vmatprep.subr.mxu0 0.0
    %80 = vmatpush1.msra.mxu0 0.0
    %81 = vmatprep.subr.mxu0 0.0
    %82 = vmatpush1.msra.mxu0 0.0
    %83 = vmatprep.subr.mxu0 0.0
    %84 = vmatpush1.msra.mxu0 0.0
    %85 = vmatprep.subr.mxu0 0.0
    %86 = vmatpush1.msra.mxu0 0.0
    %87 = vmatprep.subr.mxu0 0.0
    %88 = vmatpush1.msra.mxu0 0.0
    %89 = vmatprep.subr.mxu0 0.0
    %90 = vmatpush1.msra.mxu0 0.0
    %91 = vmatprep.subr.mxu0 0.0
    %92 = vmatpush1.msra.mxu0 0.0
    %93 = vmatprep.subr.mxu0 0.0
    %94 = vmatpush1.msra.mxu0 0.0
    %95 = vmatprep.subr.mxu0 0.0
    %96 = vmatpush1.msra.mxu0 0.0
    %97 = vmatprep.subr.mxu0 0.0
    %98 = vmatpush1.msra.mxu0 0.0
    %99 = vmatprep.subr.mxu0 0.0
    %100 = vmatpush1.msra.mxu0 %v63
    %101 = vmatprep.subr.mxu0 0.0
    %102 = vmatpush1.msra.mxu0 %v62
    %103 = vmatprep.subr.mxu0 0.0
    %104 = vmatpush2.msra.mxu0 0.0
    %105 = vmatprep.subr.mxu0 0.0
    %106 = vmatpush2.msra.mxu0 0.0
    %107 = vmatprep.subr.mxu0 0.0
    %108 = vmatpush2.msra.mxu0 0.0
    %109 = vmatprep.subr.mxu0 0.0
    %110 = vmatpush2.msra.mxu0 0.0
    %111 = vmatprep.subr.mxu0 0.0
    %112 = vmatpush2.msra.mxu0 0.0
    %113 = vmatprep.subr.mxu0 0.0
    %114 = vmatpush2.msra.mxu0 0.0
    %115 = vmatprep.subr.mxu0 0.0
    %116 = vmatpush2.msra.mxu0 0.0
    %117 = vmatprep.subr.mxu0 0.0
    %118 = vmatpush2.msra.mxu0 0.0
    %119 = vmatprep.subr.mxu0 0.0
    %120 = vmatpush2.msra.mxu0 0.0
    %121 = vmatprep.subr.mxu0 0.0
    %122 = vmatpush2.msra.mxu0 0.0
    %123 = vmatprep.subr.mxu0 0.0
    %124 = vmatpush2.msra.mxu0 0.0
    %125 = vmatprep.subr.mxu0 0.0
    %126 = vmatpush2.msra.mxu0 0.0
    %127 = vmatprep.subr.mxu0 0.0
    %128 = vmatpush2.msra.mxu0 0.0
    %129 = vmatprep.subr.mxu0 0.0
    %130 = vmatpush2.msra.mxu0 0.0
    %131 = vmatprep.subr.mxu0 0.0
    %132 = vmatpush2.msra.mxu0 0.0
    %133 = vmatprep.subr.mxu0 0.0
    %134 = vmatpush2.msra.mxu0 0.0
    %135 = vmatprep.mubr.f32.mxu0 0.0
    %136 = vmatmul.mubr.f32.gmra.mxu0 %v66
    %v137 = vpop.f32.mrf.mxu0
    %v138 = vadd.f32 0.0, %v137
    %v139 = vpop.f32.mrf.mxu0
    %140 = vmatprep.mubr.f32.mxu0 0.0
    %141 = vmatmul.mubr.f32.gmra.mxu0 %v69
    %v142 = vpop.f32.mrf.mxu0
    %v143 = vadd.f32 0.0, %v142
    %v144 = vpop.f32.mrf.mxu0
    %145 = vdwg.mxu0
    %vm146 = vcmask 261120
    %v148 = vsel %vm146, %v138, 0
    %v151 = vsel %vm146, %v143, 0
    %153 = vmatprep.subr.mxu0 0.0
    %154 = vmatpush1.msra.mxu0 0.0
    %155 = vmatprep.subr.mxu0 0.0
    %156 = vmatpush1.msra.mxu0 0.0
    %157 = vmatprep.subr.mxu0 0.0
    %158 = vmatpush1.msra.mxu0 0.0
    %159 = vmatprep.subr.mxu0 0.0
    %160 = vmatpush1.msra.mxu0 0.0
    %161 = vmatprep.subr.mxu0 0.0
    %162 = vmatpush1.msra.mxu0 0.0
    %163 = vmatprep.subr.mxu0 0.0
    %164 = vmatpush1.msra.mxu0 0.0
    %165 = vmatprep.subr.mxu0 0.0
    %166 = vmatpush1.msra.mxu0 0.0
    %167 = vmatprep.subr.mxu0 0.0
    %168 = vmatpush1.msra.mxu0 0.0
    %169 = vmatprep.subr.mxu0 0.0
    %170 = vmatpush1.msra.mxu0 0.0
    %171 = vmatprep.subr.mxu0 0.0
    %172 = vmatpush1.msra.mxu0 0.0
    %173 = vmatprep.subr.mxu0 0.0
    %174 = vmatpush1.msra.mxu0 0.0
    %175 = vmatprep.subr.mxu0 0.0
    %176 = vmatpush1.msra.mxu0 0.0
    %177 = vmatprep.subr.mxu0 0.0
    %178 = vmatpush1.msra.mxu0 %v61
    %179 = vmatprep.subr.mxu0 0.0
    %180 = vmatpush1.msra.mxu0 %v60
    %181 = vmatprep.subr.mxu0 0.0
    %182 = vmatpush1.msra.mxu0 %v59
    %183 = vmatprep.subr.mxu0 0.0
    %184 = vmatpush1.msra.mxu0 %v58
    %185 = vmatprep.subr.mxu0 0.0
    %186 = vmatpush2.msra.mxu0 0.0
    %187 = vmatprep.subr.mxu0 0.0
    %188 = vmatpush2.msra.mxu0 0.0
    %189 = vmatprep.subr.mxu0 0.0
    %190 = vmatpush2.msra.mxu0 0.0
    %191 = vmatprep.subr.mxu0 0.0
    %192 = vmatpush2.msra.mxu0 0.0
    %193 = vmatprep.subr.mxu0 0.0
    %194 = vmatpush2.msra.mxu0 0.0
    %195 = vmatprep.subr.mxu0 0.0
    %196 = vmatpush2.msra.mxu0 0.0
    %197 = vmatprep.subr.mxu0 0.0
    %198 = vmatpush2.msra.mxu0 0.0
    %199 = vmatprep.subr.mxu0 0.0
    %200 = vmatpush2.msra.mxu0 0.0
    %201 = vmatprep.subr.mxu0 0.0
    %202 = vmatpush2.msra.mxu0 0.0
    %203 = vmatprep.subr.mxu0 0.0
    %204 = vmatpush2.msra.mxu0 0.0
    %205 = vmatprep.subr.mxu0 0.0
    %206 = vmatpush2.msra.mxu0 0.0
    %207 = vmatprep.subr.mxu0 0.0
    %208 = vmatpush2.msra.mxu0 0.0
    %209 = vmatprep.subr.mxu0 0.0
    %210 = vmatpush2.msra.mxu0 0.0
    %211 = vmatprep.subr.mxu0 0.0
    %212 = vmatpush2.msra.mxu0 0.0
    %213 = vmatprep.subr.mxu0 0.0
    %214 = vmatpush2.msra.mxu0 0.0
    %215 = vmatprep.subr.mxu0 0.0
    %216 = vmatpush2.msra.mxu0 0.0
    %217 = vmatprep.mubr.f32.mxu0 0.0
    %218 = vmatmul.mubr.f32.gmra.mxu0 %v148
    %v219 = vpop.f32.mrf.mxu0
    %v220 = vadd.f32 0.0, %v219
    %v221 = vpop.f32.mrf.mxu0
    %222 = vmatprep.mubr.f32.mxu0 0.0
    %223 = vmatmul.mubr.f32.gmra.mxu0 %v151
    %v224 = vpop.f32.mrf.mxu0
    %v225 = vadd.f32 0.0, %v224
    %v226 = vpop.f32.mrf.mxu0
    %227 = vdwg.mxu0
    %v228 = vmax.f32 %v220, 0.0
    %v229 = vmax.f32 %v225, 0.0
    %vm230 = vcmask 523264
    %231 = vst.msk [vmem:[#allocation8] sm:$0xff] %vm230, %v228
    %232 = vst.msk [vmem:[#allocation8 + $0x8] sm:$0xff] %vm230, %v229
    %s233 = scalar_lea.vmem [#allocation5], 16
    %v234 = vld [vmem:[%s233] sm:$0xff]
    %v235 = vld [vmem:[%s233 + $0x8] sm:$0xff]
    %236 = vmatprep.subr.mxu0 0.0
    %237 = vmatpush1.msra.mxu0 0.0
    %238 = vmatprep.subr.mxu0 0.0
    %239 = vmatpush1.msra.mxu0 0.0
    %240 = vmatprep.subr.mxu0 0.0
    %241 = vmatpush1.msra.mxu0 0.0
    %242 = vmatprep.subr.mxu0 0.0
    %243 = vmatpush1.msra.mxu0 0.0
    %244 = vmatprep.subr.mxu0 0.0
    %245 = vmatpush1.msra.mxu0 0.0
    %246 = vmatprep.subr.mxu0 0.0
    %247 = vmatpush1.msra.mxu0 0.0
    %248 = vmatprep.subr.mxu0 0.0
    %249 = vmatpush1.msra.mxu0 0.0
    %250 = vmatprep.subr.mxu0 0.0
    %251 = vmatpush1.msra.mxu0 0.0
    %252 = vmatprep.subr.mxu0 0.0
    %253 = vmatpush1.msra.mxu0 0.0
    %254 = vmatprep.subr.mxu0 0.0
    %255 = vmatpush1.msra.mxu0 0.0
    %256 = vmatprep.subr.mxu0 0.0
    %257 = vmatpush1.msra.mxu0 0.0
    %258 = vmatprep.subr.mxu0 0.0
    %259 = vmatpush1.msra.mxu0 0.0
    %260 = vmatprep.subr.mxu0 0.0
    %261 = vmatpush1.msra.mxu0 0.0
    %262 = vmatprep.subr.mxu0 0.0
    %263 = vmatpush1.msra.mxu0 0.0
    %264 = vmatprep.subr.mxu0 0.0
    %265 = vmatpush1.msra.mxu0 %v235
    %266 = vmatprep.subr.mxu0 0.0
    %267 = vmatpush1.msra.mxu0 %v234
    %268 = vmatprep.subr.mxu0 0.0
    %269 = vmatpush2.msra.mxu0 0.0
    %270 = vmatprep.subr.mxu0 0.0
    %271 = vmatpush2.msra.mxu0 0.0
    %272 = vmatprep.subr.mxu0 0.0
    %273 = vmatpush2.msra.mxu0 0.0
    %274 = vmatprep.subr.mxu0 0.0
    %275 = vmatpush2.msra.mxu0 0.0
    %276 = vmatprep.subr.mxu0 0.0
    %277 = vmatpush2.msra.mxu0 0.0
    %278 = vmatprep.subr.mxu0 0.0
    %279 = vmatpush2.msra.mxu0 0.0
    %280 = vmatprep.subr.mxu0 0.0
    %281 = vmatpush2.msra.mxu0 0.0
    %282 = vmatprep.subr.mxu0 0.0
    %283 = vmatpush2.msra.mxu0 0.0
    %284 = vmatprep.subr.mxu0 0.0
    %285 = vmatpush2.msra.mxu0 0.0
    %286 = vmatprep.subr.mxu0 0.0
    %287 = vmatpush2.msra.mxu0 0.0
    %288 = vmatprep.subr.mxu0 0.0
    %289 = vmatpush2.msra.mxu0 0.0
    %290 = vmatprep.subr.mxu0 0.0
    %291 = vmatpush2.msra.mxu0 0.0
    %292 = vmatprep.subr.mxu0 0.0
    %293 = vmatpush2.msra.mxu0 0.0
    %294 = vmatprep.subr.mxu0 0.0
    %295 = vmatpush2.msra.mxu0 0.0
    %296 = vmatprep.subr.mxu0 0.0
    %297 = vmatpush2.msra.mxu0 0.0
    %298 = vmatprep.subr.mxu0 0.0
    %299 = vmatpush2.msra.mxu0 0.0
    %300 = vmatprep.mubr.f32.mxu0 0.0
    %301 = vmatmul.mubr.f32.gmra.mxu0 %v66
    %v302 = vpop.f32.mrf.mxu0
    %v303 = vadd.f32 0.0, %v302
    %v304 = vpop.f32.mrf.mxu0
    %305 = vmatprep.mubr.f32.mxu0 0.0
    %306 = vmatmul.mubr.f32.gmra.mxu0 %v69
    %v307 = vpop.f32.mrf.mxu0
    %v308 = vadd.f32 0.0, %v307
    %v309 = vpop.f32.mrf.mxu0
    %310 = vdwg.mxu0
    %v312 = vsel %vm146, %v303, 0
    %v315 = vsel %vm146, %v308, 0
    %317 = vmatprep.subr.mxu0 0.0
    %318 = vmatpush1.msra.mxu0 0.0
    %319 = vmatprep.subr.mxu0 0.0
    %320 = vmatpush1.msra.mxu0 0.0
    %321 = vmatprep.subr.mxu0 0.0
    %322 = vmatpush1.msra.mxu0 0.0
    %323 = vmatprep.subr.mxu0 0.0
    %324 = vmatpush1.msra.mxu0 0.0
    %325 = vmatprep.subr.mxu0 0.0
    %326 = vmatpush1.msra.mxu0 0.0
    %327 = vmatprep.subr.mxu0 0.0
    %328 = vmatpush1.msra.mxu0 0.0
    %329 = vmatprep.subr.mxu0 0.0
    %330 = vmatpush1.msra.mxu0 0.0
    %331 = vmatprep.subr.mxu0 0.0
    %332 = vmatpush1.msra.mxu0 0.0
    %333 = vmatprep.subr.mxu0 0.0
    %334 = vmatpush1.msra.mxu0 0.0
    %335 = vmatprep.subr.mxu0 0.0
    %336 = vmatpush1.msra.mxu0 0.0
    %337 = vmatprep.subr.mxu0 0.0
    %338 = vmatpush1.msra.mxu0 0.0
    %339 = vmatprep.subr.mxu0 0.0
    %340 = vmatpush1.msra.mxu0 0.0
    %341 = vmatprep.subr.mxu0 0.0
    %342 = vmatpush1.msra.mxu0 %v61
    %343 = vmatprep.subr.mxu0 0.0
    %344 = vmatpush1.msra.mxu0 %v60
    %345 = vmatprep.subr.mxu0 0.0
    %346 = vmatpush1.msra.mxu0 %v59
    %347 = vmatprep.subr.mxu0 0.0
    %348 = vmatpush1.msra.mxu0 %v58
    %349 = vmatprep.subr.mxu0 0.0
    %350 = vmatpush2.msra.mxu0 0.0
    %351 = vmatprep.subr.mxu0 0.0
    %352 = vmatpush2.msra.mxu0 0.0
    %353 = vmatprep.subr.mxu0 0.0
    %354 = vmatpush2.msra.mxu0 0.0
    %355 = vmatprep.subr.mxu0 0.0
    %356 = vmatpush2.msra.mxu0 0.0
    %357 = vmatprep.subr.mxu0 0.0
    %358 = vmatpush2.msra.mxu0 0.0
    %359 = vmatprep.subr.mxu0 0.0
    %360 = vmatpush2.msra.mxu0 0.0
    %361 = vmatprep.subr.mxu0 0.0
    %362 = vmatpush2.msra.mxu0 0.0
    %363 = vmatprep.subr.mxu0 0.0
    %364 = vmatpush2.msra.mxu0 0.0
    %365 = vmatprep.subr.mxu0 0.0
    %366 = vmatpush2.msra.mxu0 0.0
    %367 = vmatprep.subr.mxu0 0.0
    %368 = vmatpush2.msra.mxu0 0.0
    %369 = vmatprep.subr.mxu0 0.0
    %370 = vmatpush2.msra.mxu0 0.0
    %371 = vmatprep.subr.mxu0 0.0
    %372 = vmatpush2.msra.mxu0 0.0
    %373 = vmatprep.subr.mxu0 0.0
    %374 = vmatpush2.msra.mxu0 0.0
    %375 = vmatprep.subr.mxu0 0.0
    %376 = vmatpush2.msra.mxu0 0.0
    %377 = vmatprep.subr.mxu0 0.0
    %378 = vmatpush2.msra.mxu0 0.0
    %379 = vmatprep.subr.mxu0 0.0
    %380 = vmatpush2.msra.mxu0 0.0
    %381 = vmatprep.mubr.f32.mxu0 0.0
    %382 = vmatmul.mubr.f32.gmra.mxu0 %v312
    %v383 = vpop.f32.mrf.mxu0
    %v384 = vadd.f32 0.0, %v383
    %v385 = vpop.f32.mrf.mxu0
    %386 = vmatprep.mubr.f32.mxu0 0.0
    %387 = vmatmul.mubr.f32.gmra.mxu0 %v315
    %v388 = vpop.f32.mrf.mxu0
    %v389 = vadd.f32 0.0, %v388
    %v390 = vpop.f32.mrf.mxu0
    %391 = vdwg.mxu0
    %v392 = vmax.f32 %v384, 0.0
    %v393 = vmax.f32 %v389, 0.0
    %s394 = scalar_lea.vmem [#allocation8], 16
    %395 = vst.msk [vmem:[%s394] sm:$0xff] %vm230, %v392
    %396 = vst.msk [vmem:[%s394 + $0x8] sm:$0xff] %vm230, %v393
    // Predicated region
    $region26: #{tpu_custom_call.1} parent=1 // pred_check
      _
    $region27: #{tpu_custom_call.1} parent=1 // pred_check_branch
      %398 = sbr.rel (0) target = $region29
    $region28: #{tpu_custom_call.1} parent=1 // pred_region
      %s400 = ssub.s32 512, 512
      %401 = vsyncadd [#allocation4], %s400
      %s402 = sshll.u32 [#allocation8], 4
      %s403 = int_to_ptr.vmem [resolvable:$true] %s402
      %408 = dma.vmem_to_hbm [thread:$0]  %s403, 512, %s3, [#allocation4], 128, 128, 8
    $region29: #{tpu_custom_call.1} parent=1 // pred_fallthru
      _
    // Predicated region
    $region30: #{tpu_custom_call.1} parent=1 // pred_check
      _
    $region31: #{tpu_custom_call.1} parent=1 // pred_check_branch
      %410 = sbr.rel (0) target = $region33
    $region32: #{tpu_custom_call.1} parent=1 // pred_region
      %411 = dma.done [#allocation4], 512
    $region33: #{tpu_custom_call.1} parent=1 // pred_fallthru
      _
    %412 = vsyncpa [#allocation3], 1
    %413 = vsyncpa [#allocation6], 1
    %414 = vsyncpa [#allocation4], 1

</llo_original>
